<compile_context>
chip_gen: v7x
topology: tpu7x:2x2x1
jax: 0.10.0
libtpu: 0.0.40
codegen_flags: <defaults>
</compile_context>

<pallas_src>
import jax
import jax.numpy as jnp
from jax.experimental import pallas as pl
from jax.experimental.pallas import tpu as pltpu


# Per live f32 running array (~16 vregs); three arrays live at once (~48 vregs).
_LIVE_CAP_ELEMS = 16384


def _pick_chunk(C, width):
    """Lane-chunk width for the in-tile reduction loop (bounds live vregs)."""
    if C * width <= _LIVE_CAP_ELEMS:
        return width
    for cand in (1024, 512, 256):
        if C * cand <= _LIVE_CAP_ELEMS:
            return cand
    return 128


def _make_kernel(*, n_b, C, HW, t_hw, chunk, k_hw, last_eff):
    inv_hw = 1.0 / float(HW)

    def tile_reduce(x_ref, sum_acc, max_acc, eff):
        """Accumulate spatial sum/max of the first `eff` lanes of this tile."""
        n_full = eff // chunk
        tail = eff - n_full * chunk
        unroll = n_full if n_full <= 8 else 4

        for i in range(n_b):                       # static loop over packed samples
            if n_full > 0:
                def body(c, carry):
                    s, m = carry
                    start = pl.multiple_of(c * chunk, chunk)
                    xc = x_ref[i, :, pl.ds(start, chunk)].astype(jnp.float32)
                    return s + xc, jnp.maximum(m, xc)

                s0 = jnp.zeros((C, chunk), jnp.float32)
                m0 = jnp.full((C, chunk), -jnp.inf, jnp.float32)
                s, m = jax.lax.fori_loop(0, n_full, body, (s0, m0), unroll=unroll)
                s_tot = jnp.sum(s, axis=-1, keepdims=True)          # (C, 1)
                m_tot = jnp.max(m, axis=-1, keepdims=True)           # (C, 1)
            else:
                s_tot = jnp.zeros((C, 1), jnp.float32)
                m_tot = jnp.full((C, 1), -jnp.inf, jnp.float32)

            if tail > 0:
                # Static tail slice: valid data, no masking needed.
                xt = x_ref[i, :, pl.ds(n_full * chunk, tail)].astype(jnp.float32)
                s_tot = s_tot + jnp.sum(xt, axis=-1, keepdims=True)
                m_tot = jnp.maximum(m_tot, jnp.max(xt, axis=-1, keepdims=True))

            col = pl.ds(i, 1)
            sum_acc[:, col] = sum_acc[:, col] + s_tot
            max_acc[:, col] = jnp.maximum(max_acc[:, col], m_tot)

    def kernel(x_ref, w1_ref, w2_ref, o_ref, sum_acc, max_acc):
        # x_ref:   (n_b, C, t_hw)  current (batch-group, hw-tile) block
        # w1_ref:  (hid, C)        fc1 weight
        # w2_ref:  (C, hid)        fc2 weight
        # o_ref:   (n_b, C, 1)     attention output for this batch group
        # sum_acc: (C, n_b) f32    running spatial sum (column per sample)
        # max_acc: (C, n_b) f32    running spatial max
        k = pl.program_id(1)

        @pl.when(k == 0)
        def _init():
            sum_acc[...] = jnp.zeros_like(sum_acc)
            max_acc[...] = jnp.full_like(max_acc, -jnp.inf)

        if k_hw == 1 or last_eff == t_hw:
            tile_reduce(x_ref, sum_acc, max_acc, t_hw)
        else:
            @pl.when(k < k_hw - 1)
            def _full_tiles():
                tile_reduce(x_ref, sum_acc, max_acc, t_hw)

            @pl.when(k == k_hw - 1)
            def _ragged_last_tile():
                tile_reduce(x_ref, sum_acc, max_acc, last_eff)

        # Finalize: tiny shared MLP + sigmoid, once per batch group.
        @pl.when(k == k_hw - 1)
        def _finalize():
            avg = sum_acc[...] * inv_hw                          # (C, n_b)
            mx = max_acc[...]                                    # (C, n_b)
            w1 = w1_ref[...].astype(jnp.float32)                 # (hid, C)
            w2 = w2_ref[...].astype(jnp.float32)                 # (C, hid)
            h = (jnp.maximum(jnp.dot(w1, avg, preferred_element_type=jnp.float32), 0.0)
                 + jnp.maximum(jnp.dot(w1, mx, preferred_element_type=jnp.float32), 0.0))
            y = jnp.dot(w2, h, preferred_element_type=jnp.float32)   # (C, n_b)
            att = jax.nn.sigmoid(y).astype(o_ref.dtype)
            for i in range(n_b):
                o_ref[i] = att[:, i:i + 1]                        # (C, 1) column store

    return kernel


def channel_attention(x_nchw, w1, w2, *, max_block_bytes=8 * 1024 * 1024):
    """x_nchw: (N, C, H, W); w1: (C//r, C); w2: (C, C//r). Returns (N, C, 1, 1)."""
    N, C, H, W = x_nchw.shape
    HW = H * W
    hid, c_in = w1.shape
    assert c_in == C and w2.shape == (C, hid)

    # Free reshape (no data movement): channels stay on sublanes, flattened
    # spatial goes to lanes.
    x = x_nchw.reshape(N, C, HW)
    bpe = jnp.dtype(x.dtype).itemsize
    sample_bytes = C * HW * bpe

    # ---- HW (lane) tiling ---------------------------------------------------
    if sample_bytes <= max_block_bytes or HW <= 128:
        t_hw = HW                                  # whole spatial extent per block
    else:
        budget_elems = max(128, max_block_bytes // (bpe * C))
        t_hw = max(128, (budget_elems // 128) * 128)   # bounded, 128-aligned tile
    k_hw = (HW + t_hw - 1) // t_hw
    last_eff = HW - (k_hw - 1) * t_hw              # valid width of the last tile

    # ---- batch packing (amortize per-step overhead for small feature maps) --
    # Keep >=2 parallel grid steps when N >= 2 so both v7x TensorCores get work.
    max_nb_parallel = max(1, N // 2) if N >= 2 else 1
    max_nb_budget = max(1, max_block_bytes // max(1, C * t_hw * bpe))
    max_nb = min(max_nb_parallel, max_nb_budget, N, 8)
    n_b = 1
    for cand in range(max_nb, 0, -1):
        if N % cand == 0:                          # divisor of N: no ragged batch blocks
            n_b = cand
            break

    chunk = _pick_chunk(C, t_hw)

    kernel = _make_kernel(n_b=n_b, C=C, HW=HW, t_hw=t_hw, chunk=chunk,
                          k_hw=k_hw, last_eff=last_eff)

    # Explicit VMEM budget: 2x double-buffered x blocks + generous headroom for
    # weights / output / scratch / temporaries.  Overrides v5e's 16 MiB scoped
    # default; stays well under v7x's 64 MiB physical VMEM.
    block_bytes = n_b * C * t_hw * bpe
    vmem_limit = int(min(max(2 * block_bytes + (8 << 20), 16 << 20), 56 << 20))

    out = pl.pallas_call(
        kernel,
        out_shape=jax.ShapeDtypeStruct((N, C, 1), x.dtype),
        grid_spec=pltpu.PrefetchScalarGridSpec(
            num_scalar_prefetch=0,
            grid=(N // n_b, k_hw),
            in_specs=[
                pl.BlockSpec((n_b, C, t_hw), lambda n, k: (n, 0, k)),
                pl.BlockSpec((hid, C), lambda n, k: (0, 0)),
                pl.BlockSpec((C, hid), lambda n, k: (0, 0)),
            ],
            out_specs=pl.BlockSpec((n_b, C, 1), lambda n, k: (n, 0, 0)),
            scratch_shapes=[
                pltpu.VMEM((C, n_b), jnp.float32),   # running spatial sum
                pltpu.VMEM((C, n_b), jnp.float32),   # running spatial max
            ],
        ),
        compiler_params=pltpu.CompilerParams(
            dimension_semantics=("parallel", "arbitrary"),
            vmem_limit_bytes=vmem_limit),
    )(x, w1, w2)

    # (N, C, 1) -> (N, C, 1, 1): free reshape, no transpose.
    return out.reshape(N, C, 1, 1)


def channel_attention_ref(x_nchw, w1, w2):
    """Pure-JAX reference mirroring the PyTorch module."""
    xf = x_nchw.astype(jnp.float32)
    avg = jnp.mean(xf, axis=(2, 3))                # (N, C)
    mx = jnp.max(xf, axis=(2, 3))                  # (N, C)

    def mlp(v):
        h = jnp.maximum(v @ w1.astype(jnp.float32).T, 0.0)   # (N, C//r)
        return h @ w2.astype(jnp.float32).T                  # (N, C)

    out = jax.nn.sigmoid(mlp(avg) + mlp(mx))       # (N, C)
    return out[:, :, None, None].astype(x_nchw.dtype)


if __name__ == "__main__":
    root = jax.random.PRNGKey(0)
    keys = jax.random.split(root, 3)

    def check(case_key, N, C, ratio, H, W, **kwargs):
        hid = C // ratio
        kx, k1, k2 = jax.random.split(case_key, 3)
        x = jax.random.normal(kx, (N, C, H, W), dtype=jnp.float32)
        w1 = jax.random.normal(k1, (hid, C), dtype=jnp.float32) * 0.1   # fc1 weight
        w2 = jax.random.normal(k2, (C, hid), dtype=jnp.float32) * 0.1   # fc2 weight
        out = jax.block_until_ready(channel_attention(x, w1, w2, **kwargs))
        ref = channel_attention_ref(x, w1, w2)
        assert out.shape == (N, C, 1, 1)
        assert jnp.allclose(out, ref, atol=2e-5, rtol=1e-5), "mismatch vs reference"

    # Base case: in_planes=64, ratio=16 (hidden=4), 16x16 feature map.
    check(keys[0], N=2, C=64, ratio=16, H=16, W=16)
    # Batch-packed path (n_b=4): tiny feature map, several samples per block.
    check(keys[1], N=8, C=32, ratio=16, H=4, W=4)
    # HW-tiled path with a ragged last tile (tiny block budget forces tiling).
    check(keys[2], N=2, C=16, ratio=16, H=13, W=29, max_block_bytes=8192)

    print("KERNEL_OK")
</pallas_src>

<mosaic_0001>
module attributes {stable_mosaic.version = 11 : i64} {
  func.func @kernel(%arg0: i32, %arg1: i32, %arg2: memref<1x64x256xf32, #tpu.memory_space<vmem>>, %arg3: memref<4x64xf32, #tpu.memory_space<vmem>>, %arg4: memref<64x4xf32, #tpu.memory_space<vmem>>, %arg5: memref<1x64x1xf32, #tpu.memory_space<vmem>>, %arg6: memref<64x1xf32, #tpu.memory_space<vmem>>, %arg7: memref<64x1xf32, #tpu.memory_space<vmem>>) attributes {dimension_semantics = [#tpu.dimension_semantics<parallel>, #tpu.dimension_semantics<arbitrary>], iteration_bounds = array<i64: 2, 1>, scalar_prefetch = 0 : i64, scratch_operands = 2 : i64, tpu.core_type = #tpu.core_type<tc>, window_params = [{transform_indices = @transform_0, window_bounds = array<i64: 1, 64, 256>}, {pipeline_mode = #tpu.pipeline_mode<synchronous>, transform_indices = @transform_1, window_bounds = array<i64: 4, 64>}, {pipeline_mode = #tpu.pipeline_mode<synchronous>, transform_indices = @transform_2, window_bounds = array<i64: 64, 4>}, {transform_indices = @transform_3, window_bounds = array<i64: 1, 64, 1>}]} {
    %c0_i32 = arith.constant 0 : i32
    %0 = arith.cmpi eq, %arg1, %c0_i32 : i32
    %1 = arith.extui %0 : i1 to i32
    %c0_i32_0 = arith.constant 0 : i32
    %2 = arith.cmpi ne, %1, %c0_i32_0 : i32
    scf.if %2 {
      %cst_16 = arith.constant 0.000000e+00 : f32
      %25 = vector.broadcast %cst_16 : f32 to vector<64x1xf32>
      %c0_17 = arith.constant 0 : index
      %c0_18 = arith.constant 0 : index
      %26 = vector.load %arg6[%c0_17, %c0_18] : memref<64x1xf32, #tpu.memory_space<vmem>>, vector<64x1xf32>
      tpu.vector_store %arg6[%c0_17, %c0_18], %25 {strides = array<i32>} : memref<64x1xf32, #tpu.memory_space<vmem>>, vector<64x1xf32>,
      %cst_19 = arith.constant 0xFF800000 : f32
      %27 = vector.broadcast %cst_19 : f32 to vector<64x1xf32>
      %c0_20 = arith.constant 0 : index
      %c0_21 = arith.constant 0 : index
      %28 = vector.load %arg7[%c0_20, %c0_21] : memref<64x1xf32, #tpu.memory_space<vmem>>, vector<64x1xf32>
      tpu.vector_store %arg7[%c0_20, %c0_21], %27 {strides = array<i32>} : memref<64x1xf32, #tpu.memory_space<vmem>>, vector<64x1xf32>,
    } else {
    }
    %cst = arith.constant 0.000000e+00 : f32
    %3 = vector.broadcast %cst : f32 to vector<64x256xf32>
    %cst_1 = arith.constant 0xFF800000 : f32
    %4 = vector.broadcast %cst_1 : f32 to vector<64x256xf32>
    %c0_i32_2 = arith.constant 0 : i32
    %c256_i32 = arith.constant 256 : i32
    %5 = arith.muli %c0_i32_2, %c256_i32 : i32
    %6 = tpu.assume_multiple %5, 256 : i32
    %c0 = arith.constant 0 : index
    %c0_3 = arith.constant 0 : index
    %7 = arith.index_cast %6 : i32 to index
    %8 = vector.load %arg2[%c0, %c0_3, %7] : memref<1x64x256xf32, #tpu.memory_space<vmem>>, vector<1x64x256xf32>
    %9 = vector.shape_cast %8 : vector<1x64x256xf32> to vector<64x256xf32>
    %10 = arith.addf %3, %9 : vector<64x256xf32>
    %11 = arith.maximumf %4, %9 : vector<64x256xf32>
    %c1_i32 = arith.constant 1 : i32
    %cst_4 = arith.constant dense<0.000000e+00> : vector<64xf32>
    %12 = vector.multi_reduction <add>, %10, %cst_4 [1] : vector<64x256xf32> to vector<64xf32>
    %13 = vector.shape_cast %12 : vector<64xf32> to vector<64x1xf32>
    %cst_5 = arith.constant dense<0xFF800000> : vector<64xf32>
    %14 = vector.multi_reduction <maximumf>, %11, %cst_5 [1] : vector<64x256xf32> to vector<64xf32>
    %15 = vector.shape_cast %14 : vector<64xf32> to vector<64x1xf32>
    %c0_6 = arith.constant 0 : index
    %c0_7 = arith.constant 0 : index
    %16 = vector.load %arg6[%c0_6, %c0_7] : memref<64x1xf32, #tpu.memory_space<vmem>>, vector<64x1xf32>
    %17 = arith.addf %16, %13 : vector<64x1xf32>
    %c0_8 = arith.constant 0 : index
    %c0_9 = arith.constant 0 : index
    %18 = vector.load %arg6[%c0_8, %c0_9] : memref<64x1xf32, #tpu.memory_space<vmem>>, vector<64x1xf32>
    tpu.vector_store %arg6[%c0_8, %c0_9], %17 {strides = array<i32>} : memref<64x1xf32, #tpu.memory_space<vmem>>, vector<64x1xf32>,
    %c0_10 = arith.constant 0 : index
    %c0_11 = arith.constant 0 : index
    %19 = vector.load %arg7[%c0_10, %c0_11] : memref<64x1xf32, #tpu.memory_space<vmem>>, vector<64x1xf32>
    %20 = arith.maximumf %19, %15 : vector<64x1xf32>
    %c0_12 = arith.constant 0 : index
    %c0_13 = arith.constant 0 : index
    %21 = vector.load %arg7[%c0_12, %c0_13] : memref<64x1xf32, #tpu.memory_space<vmem>>, vector<64x1xf32>
    tpu.vector_store %arg7[%c0_12, %c0_13], %20 {strides = array<i32>} : memref<64x1xf32, #tpu.memory_space<vmem>>, vector<64x1xf32>,
    %c0_i32_14 = arith.constant 0 : i32
    %22 = arith.cmpi eq, %arg1, %c0_i32_14 : i32
    %23 = arith.extui %22 : i1 to i32
    %c0_i32_15 = arith.constant 0 : i32
    %24 = arith.cmpi ne, %23, %c0_i32_15 : i32
    scf.if %24 {
      %c0_16 = arith.constant 0 : index
      %c0_17 = arith.constant 0 : index
      %25 = vector.load %arg6[%c0_16, %c0_17] : memref<64x1xf32, #tpu.memory_space<vmem>>, vector<64x1xf32>
      %cst_18 = arith.constant 3.906250e-03 : f32
      %26 = vector.broadcast %cst_18 : f32 to vector<64x1xf32>
      %27 = arith.mulf %25, %26 : vector<64x1xf32>
      %c0_19 = arith.constant 0 : index
      %c0_20 = arith.constant 0 : index
      %28 = vector.load %arg7[%c0_19, %c0_20] : memref<64x1xf32, #tpu.memory_space<vmem>>, vector<64x1xf32>
      %c0_21 = arith.constant 0 : index
      %c0_22 = arith.constant 0 : index
      %29 = vector.load %arg3[%c0_21, %c0_22] : memref<4x64xf32, #tpu.memory_space<vmem>>, vector<4x64xf32>
      %c0_23 = arith.constant 0 : index
      %c0_24 = arith.constant 0 : index
      %30 = vector.load %arg4[%c0_23, %c0_24] : memref<64x4xf32, #tpu.memory_space<vmem>>, vector<64x4xf32>
      %cst_25 = arith.constant dense<0.000000e+00> : vector<4x1xf32>
      %31 = tpu.matmul %29, %27, %cst_25 {dimension_numbers = #tpu.dot_dimension_numbers<[1], [0], [0], [1], [0, 0, 1, 1], [], []>} : vector<4x64xf32>, vector<64x1xf32>, vector<4x1xf32> -> vector<4x1xf32>
      %cst_26 = arith.constant 0.000000e+00 : f32
      %32 = vector.broadcast %cst_26 : f32 to vector<4x1xf32>
      %33 = arith.maximumf %31, %32 : vector<4x1xf32>
      %cst_27 = arith.constant dense<0.000000e+00> : vector<4x1xf32>
      %34 = tpu.matmul %29, %28, %cst_27 {dimension_numbers = #tpu.dot_dimension_numbers<[1], [0], [0], [1], [0, 0, 1, 1], [], []>} : vector<4x64xf32>, vector<64x1xf32>, vector<4x1xf32> -> vector<4x1xf32>
      %cst_28 = arith.constant 0.000000e+00 : f32
      %35 = vector.broadcast %cst_28 : f32 to vector<4x1xf32>
      %36 = arith.maximumf %34, %35 : vector<4x1xf32>
      %37 = arith.addf %33, %36 : vector<4x1xf32>
      %cst_29 = arith.constant dense<0.000000e+00> : vector<64x1xf32>
      %38 = tpu.matmul %30, %37, %cst_29 {dimension_numbers = #tpu.dot_dimension_numbers<[1], [0], [0], [1], [0, 0, 1, 1], [], []>} : vector<64x4xf32>, vector<4x1xf32>, vector<64x1xf32> -> vector<64x1xf32>
      %39 = arith.negf %38 : vector<64x1xf32>
      %40 = math.exp %39 : vector<64x1xf32>
      %cst_30 = arith.constant 1.000000e+00 : f32
      %41 = vector.broadcast %cst_30 : f32 to vector<64x1xf32>
      %42 = arith.addf %41, %40 : vector<64x1xf32>
      %43 = arith.divf %41, %42 : vector<64x1xf32>
      %c0_31 = arith.constant 0 : index
      %c0_32 = arith.constant 0 : index
      %c0_33 = arith.constant 0 : index
      %44 = vector.load %arg5[%c0_31, %c0_32, %c0_33] : memref<1x64x1xf32, #tpu.memory_space<vmem>>, vector<1x64x1xf32>
      %45 = vector.shape_cast %44 : vector<1x64x1xf32> to vector<64x1xf32>
      %46 = vector.shape_cast %43 : vector<64x1xf32> to vector<1x64x1xf32>
      tpu.vector_store %arg5[%c0_31, %c0_32, %c0_33], %46 {strides = array<i32>} : memref<1x64x1xf32, #tpu.memory_space<vmem>>, vector<1x64x1xf32>,
    } else {
    }
    return
  }
  func.func @transform_0(%arg0: i32, %arg1: i32) -> (i32, i32, i32) {
    %c0_i32 = arith.constant 0 : i32
    %c0_i32_0 = arith.constant 0 : i32
    return %arg0, %c0_i32, %arg1 : i32, i32, i32
  }
  func.func @transform_1(%arg0: i32, %arg1: i32) -> (i32, i32) {
    %c0_i32 = arith.constant 0 : i32
    %c0_i32_0 = arith.constant 0 : i32
    %c0_i32_1 = arith.constant 0 : i32
    return %c0_i32, %c0_i32_0 : i32, i32
  }
  func.func @transform_2(%arg0: i32, %arg1: i32) -> (i32, i32) {
    %c0_i32 = arith.constant 0 : i32
    %c0_i32_0 = arith.constant 0 : i32
    %c0_i32_1 = arith.constant 0 : i32
    return %c0_i32, %c0_i32_0 : i32, i32
  }
  func.func @transform_3(%arg0: i32, %arg1: i32) -> (i32, i32, i32) {
    %c0_i32 = arith.constant 0 : i32
    %c0_i32_0 = arith.constant 0 : i32
    %c0_i32_1 = arith.constant 0 : i32
    return %arg0, %c0_i32, %c0_i32_0 : i32, i32, i32
  }
}

</mosaic_0001>

<llo_original>
// kernel: tpu_custom_call.1
$region0: #{tpu_custom_call.1}
  #allocation0 [shape = 'u32[]', space=smem, size = 0x4, offset = 0x4, fixed_abs, tag = 'smem constant byte address 0x4 - core index']
  #allocation1 [shape = 'u32[144,128]{1,0:T(1,128)}', space=vmem, size = 0x12000, scoped, tag = 'internal scratch']
  #allocation2 [shape = 'f32[64,1]{1,0:T(8,128)}', space=vmem, size = 0x8000, scoped, tag = 'scratch operand']
  #allocation3 [shape = 'f32[64,1]{1,0:T(8,128)}', space=vmem, size = 0x8000, scoped, tag = 'scratch operand']
  %s0 = inlined_call_operand.hbm [shape: f32[2,64,256], index: 0, kind: input, shape index: {}]
  %s1 = inlined_call_operand.vmem [shape: f32[4,64], index: 1, kind: input, shape index: {}]
  %s2 = inlined_call_operand.vmem [shape: f32[64,4], index: 2, kind: input, shape index: {}]
  %s3 = inlined_call_operand.vmem [shape: f32[2,64,1], index: 3, kind: output, shape index: {}]
  %s4 = sld [smem:[#allocation0]]
  $region57: #{tpu_custom_call.1} parent=0
    _
  %s6 = ssub.s32 1, %s4
  %s7 = scalar_select 0, %s6, %s4
  $region1: #{tpu_custom_call.1} parent=0
    #allocation4 [shape = 'u8[131072]{0}', space=vmem, size = 0x20000, scoped, tag = 'input window, operand 0']
    #allocation5 [shape = 's32[2]{0}', space=sflag, size = 0x8, scoped, tag = 'scoped memory for tpu_custom_call.1']
    %8 = vsyncpa [#allocation5], 0
    %s9 = scalar_lea.sflag [#allocation5], 1
    %10 = vsyncpa %s9, 0
    loop: start=0, step=1, limit=4
    $region2: #{tpu_custom_call.1} parent=1 // loop_pre_header
      _
    $region3: #{tpu_custom_call.1} parent=1 // loop_header
      %s12 = sphi 0, %s16
      %p13 = scmp.ge.s32.totalorder %s12, 4
      %s19 = sphi 0, %s31
      %s20 = sphi 0, %s27
      %s21 = sphi 0, %s19
      %s22 = sphi 0, %s20
      %s23 = sphi 0, %s21
      %s24 = sphi 0, %s22
      %s36 = sphi 0, %s38
      %s39 = sphi 0, %s36
      %s40 = sphi 0, %s39
      %s56 = sphi 0, %s40
      %s60 = sphi 0, %s60
      %s62 = sphi 0, %s60
      %s63 = sphi 0, %s62
      %s77 = sphi 0, %s63
      %s81 = sphi 0, %s81
      %s83 = sphi 0, %s81
      %s84 = sphi 0, %s83
      %s98 = sphi 0, %s84
      %s104 = sphi 0, %s106
      %s107 = sphi 0, %s104
      %s108 = sphi 0, %s107
      %s124 = sphi 0, %s108
    $region4: #{tpu_custom_call.1} parent=1 // loop_header_branch
      %15 = sbr.rel (%p13) target = $region8
    $region5: #{tpu_custom_call.1} parent=1 // loop_body
      %s17 = ssub.s32 %s12, 1
      %s18 = ssub.s32 %s12, 2
      %s25 = sadd.s32 1, %s20
      %p26 = scmp.ge.s32.totalorder %s25, 1
      %s27 = scalar_select %p26, 0, %s25
      %s28 = sadd.s32 1, %s19
      %s29 = scalar_select %p26, %s28, %s19
      %p30 = scmp.ge.s32.totalorder %s29, 2
      %s31 = scalar_select %p30, 0, %s29
      %s32 = ssub.s32 %s19, %s31
      %s33 = ssub.s32 %s20, %s27
      %s34 = sor.u32 %s32, %s33
      %p35 = scmp.eq.s32.totalorder %s34, 0
      %s37 = sadd.s32 %s36, 1
      %s38 = scalar_select %p35, %s36, %s37
      %p41 = pneg %p35
      %p42 = scmp.eq.s32.totalorder %s12, 1
      %p43 = por %p41, %p42
      %p44 = scmp.ne.s32.totalorder %s36, %s39
      %p45 = scmp.eq.s32.totalorder %s12, 0
      %p46 = por %p44, %p45
      %p47 = scmp.ne.s32.totalorder %s36, %s39
      %p48 = scmp.eq.s32.totalorder %s17, 1
      %p49 = por %p47, %p48
      %p50 = scmp.ne.s32.totalorder %s39, %s40
      %p51 = scmp.eq.s32.totalorder %s17, 0
      %p52 = por %p50, %p51
      %p53 = scmp.ne.s32.totalorder %s39, %s40
      %p54 = scmp.eq.s32.totalorder %s18, 1
      %p55 = por %p53, %p54
      %p57 = scmp.ne.s32.totalorder %s40, %s56
      %p58 = scmp.eq.s32.totalorder %s18, 0
      %p59 = por %p57, %p58
      %s61 = sadd.s32 %s60, 1
      %p64 = scmp.eq.s32.totalorder %s12, 1
      %p65 = scmp.ne.s32.totalorder %s60, %s62
      %p66 = scmp.eq.s32.totalorder %s12, 0
      %p67 = por %p65, %p66
      %p68 = scmp.ne.s32.totalorder %s60, %s62
      %p69 = scmp.eq.s32.totalorder %s17, 1
      %p70 = por %p68, %p69
      %p71 = scmp.ne.s32.totalorder %s62, %s63
      %p72 = scmp.eq.s32.totalorder %s17, 0
      %p73 = por %p71, %p72
      %p74 = scmp.ne.s32.totalorder %s62, %s63
      %p75 = scmp.eq.s32.totalorder %s18, 1
      %p76 = por %p74, %p75
      %p78 = scmp.ne.s32.totalorder %s63, %s77
      %p79 = scmp.eq.s32.totalorder %s18, 0
      %p80 = por %p78, %p79
      %s82 = sadd.s32 %s81, 1
      %p85 = scmp.eq.s32.totalorder %s12, 1
      %p86 = scmp.ne.s32.totalorder %s81, %s83
      %p87 = scmp.eq.s32.totalorder %s12, 0
      %p88 = por %p86, %p87
      %p89 = scmp.ne.s32.totalorder %s81, %s83
      %p90 = scmp.eq.s32.totalorder %s17, 1
      %p91 = por %p89, %p90
      %p92 = scmp.ne.s32.totalorder %s83, %s84
      %p93 = scmp.eq.s32.totalorder %s17, 0
      %p94 = por %p92, %p93
      %p95 = scmp.ne.s32.totalorder %s83, %s84
      %p96 = scmp.eq.s32.totalorder %s18, 1
      %p97 = por %p95, %p96
      %p99 = scmp.ne.s32.totalorder %s84, %s98
      %p100 = scmp.eq.s32.totalorder %s18, 0
      %p101 = por %p99, %p100
      %s102 = ssub.s32 %s19, %s31
      %p103 = scmp.eq.s32.totalorder %s102, 0
      %s105 = sadd.s32 %s104, 1
      %s106 = scalar_select %p103, %s104, %s105
      %p109 = pneg %p103
      %p110 = scmp.eq.s32.totalorder %s12, 1
      %p111 = por %p109, %p110
      %p112 = scmp.ne.s32.totalorder %s104, %s107
      %p113 = scmp.eq.s32.totalorder %s12, 0
      %p114 = por %p112, %p113
      %p115 = scmp.ne.s32.totalorder %s104, %s107
      %p116 = scmp.eq.s32.totalorder %s17, 1
      %p117 = por %p115, %p116
      %p118 = scmp.ne.s32.totalorder %s107, %s108
      %p119 = scmp.eq.s32.totalorder %s17, 0
      %p120 = por %p118, %p119
      %p121 = scmp.ne.s32.totalorder %s107, %s108
      %p122 = scmp.eq.s32.totalorder %s18, 1
      %p123 = por %p121, %p122
      %p125 = scmp.ne.s32.totalorder %s108, %s124
      %p126 = scmp.eq.s32.totalorder %s18, 0
      %p127 = por %p125, %p126
      %p128 = scmp.le.s32.totalorder 1, %s12
      %p129 = scmp.lt.s32.totalorder %s12, 3
      %p130 = pnand %p128, %p129
      %p131 = pneg %p130
      // Predicated region
      $region9: #{tpu_custom_call.1} parent=5 // pred_check
        _
      $region10: #{tpu_custom_call.1} parent=5 // pred_check_branch
        %133 = sbr.rel (%p130) target = $region12
      $region11: #{tpu_custom_call.1} parent=5 // pred_region
        %s134 = ssub.s32 %s12, 1
        // Predicated region
        $region13: #{tpu_custom_call.1} parent=11 // pred_check
          %p135 = pneg %p73
        $region14: #{tpu_custom_call.1} parent=11 // pred_check_branch
          %137 = sbr.rel (%p135) target = $region16
        $region15: #{tpu_custom_call.1} parent=11 // pred_region
          _
        $region16: #{tpu_custom_call.1} parent=11 // pred_fallthru
          _
        // Predicated region
        $region17: #{tpu_custom_call.1} parent=11 // pred_check
          %p138 = pneg %p94
        $region18: #{tpu_custom_call.1} parent=11 // pred_check_branch
          %140 = sbr.rel (%p138) target = $region20
        $region19: #{tpu_custom_call.1} parent=11 // pred_region
          _
        $region20: #{tpu_custom_call.1} parent=11 // pred_fallthru
          _
      $region12: #{tpu_custom_call.1} parent=5 // pred_fallthru
        _
      %p141 = scmp.lt.s32.totalorder %s12, 2
      // Predicated region
      $region21: #{tpu_custom_call.1} parent=5 // pred_check
        %p142 = pneg %p141
      $region22: #{tpu_custom_call.1} parent=5 // pred_check_branch
        %144 = sbr.rel (%p142) target = $region24
      $region23: #{tpu_custom_call.1} parent=5 // pred_region
        // Predicated region
        $region25: #{tpu_custom_call.1} parent=23 // pred_check
          %p145 = pneg %p46
        $region26: #{tpu_custom_call.1} parent=23 // pred_check_branch
          %147 = sbr.rel (%p145) target = $region28
        $region27: #{tpu_custom_call.1} parent=23 // pred_region
          %s148 = sand.u32 %s36, 1
          %s149 = scalar_lea.sflag [#allocation5], %s148
          %s150 = sand.u32 %s36, 1
          %s151 = smul.addr %s150, 128
          %s152 = scalar_lea.vmem [#allocation4], %s151
          %s153 = smul.u32 2, %s20
          %s155 = ssub.s32 2048, 2048
          %156 = vsyncadd %s149, %s155
          %s157 = smul.addr %s19, 16
          %s158 = sadd.s32 %s153, %s157
          %s159 = smul.addr %s158, 128
          %s160 = scalar_lea.hbm %s0, %s159
          %s161 = sshll.u32 %s152, 4
          %s162 = int_to_ptr.vmem [resolvable:$true] %s161
          %167 = dma.hbm_to_vmem [thread:$0]  %s160, 2048, %s162, %s149, 256, 256, 16
        $region28: #{tpu_custom_call.1} parent=23 // pred_fallthru
          _
      $region24: #{tpu_custom_call.1} parent=5 // pred_fallthru
        _
      %p168 = scmp.le.s32.totalorder 1, %s12
      %p169 = scmp.lt.s32.totalorder %s12, 3
      %p170 = pnand %p168, %p169
      %p171 = pneg %p170
      // Predicated region
      $region29: #{tpu_custom_call.1} parent=5 // pred_check
        _
      $region30: #{tpu_custom_call.1} parent=5 // pred_check_branch
        %173 = sbr.rel (%p170) target = $region32
      $region31: #{tpu_custom_call.1} parent=5 // pred_region
        %s174 = ssub.s32 %s12, 1
        %s175 = sand.u32 %s39, 1
        %s176 = scalar_lea.sflag [#allocation5], %s175
        %s177 = sand.u32 %s39, 1
        %s178 = smul.addr %s177, 128
        %s179 = scalar_lea.vmem [#allocation4], %s178
        // Predicated region
        $region33: #{tpu_custom_call.1} parent=31 // pred_check
          %p180 = pneg %p52
        $region34: #{tpu_custom_call.1} parent=31 // pred_check_branch
          %182 = sbr.rel (%p180) target = $region36
        $region35: #{tpu_custom_call.1} parent=31 // pred_region
          %183 = dma.done %s176, 2048
        $region36: #{tpu_custom_call.1} parent=31 // pred_fallthru
          _
        %s184 = sand.u32 %s39, 1
        %s185 = scalar_lea.sflag [#allocation5], %s184
        %s186 = sand.u32 %s39, 1
        %s187 = smul.addr %s186, 128
        %s188 = scalar_lea.vmem [#allocation4], %s187
        %p189 = pneg %p52
        %p190 = pneg %p49
        %p191 = pneg %p73
        %p192 = pneg %p70
        %p193 = pneg %p94
        %p194 = pneg %p91
        %p195 = pneg %p120
        %p196 = pneg %p117
        %p197 = scmp.lt.s32.totalorder %s21, 1
        %s198 = scalar_select %p197, %s21, 1
        %s199 = smul.addr %s198, 8
        %s200 = smul.addr %s199, 8
        %s201 = scalar_lea.vmem %s3, %s200
        %s202 = smul.u32 2, %s22
        %p203 = scmp.lt.s32.totalorder %s21, 1
        %s204 = scalar_select %p203, %s21, 1
        %s205 = smul.addr %s204, 8
        %s206 = smul.addr %s205, 8
        %s207 = scalar_lea.vmem %s3, %s206
        %p208 = scmp.eq.s32.totalorder %s22, 0
        // Predicated region
        $region37: #{tpu_custom_call.1} parent=31 // pred_check
          %p209 = pneg %p208
        $region38: #{tpu_custom_call.1} parent=31 // pred_check_branch
          %211 = sbr.rel (%p209) target = $region40
        $region39: #{tpu_custom_call.1} parent=31 // pred_region
          %vm212 = vcmask 7168
          %213 = vst.msk [vmem:[#allocation2] sm:$0xff] %vm212, 0.0
          %214 = vst.msk [vmem:[#allocation2 + $0x8] sm:$0xff] %vm212, 0.0
          %215 = vst.msk [vmem:[#allocation2 + $0x10] sm:$0xff] %vm212, 0.0
          %216 = vst.msk [vmem:[#allocation2 + $0x18] sm:$0xff] %vm212, 0.0
          %217 = vst.msk [vmem:[#allocation2 + $0x20] sm:$0xff] %vm212, 0.0
          %218 = vst.msk [vmem:[#allocation2 + $0x28] sm:$0xff] %vm212, 0.0
          %219 = vst.msk [vmem:[#allocation2 + $0x30] sm:$0xff] %vm212, 0.0
          %220 = vst.msk [vmem:[#allocation2 + $0x38] sm:$0xff] %vm212, 0.0
          %221 = vst.msk [vmem:[#allocation3] sm:$0xff] %vm212, -inf
          %222 = vst.msk [vmem:[#allocation3 + $0x8] sm:$0xff] %vm212, -inf
          %223 = vst.msk [vmem:[#allocation3 + $0x10] sm:$0xff] %vm212, -inf
          %224 = vst.msk [vmem:[#allocation3 + $0x18] sm:$0xff] %vm212, -inf
          %225 = vst.msk [vmem:[#allocation3 + $0x20] sm:$0xff] %vm212, -inf
          %226 = vst.msk [vmem:[#allocation3 + $0x28] sm:$0xff] %vm212, -inf
          %227 = vst.msk [vmem:[#allocation3 + $0x30] sm:$0xff] %vm212, -inf
          %228 = vst.msk [vmem:[#allocation3 + $0x38] sm:$0xff] %vm212, -inf
        $region40: #{tpu_custom_call.1} parent=31 // pred_fallthru
          _
        %v229 = vld [vmem:[%s179] sm:$0xff]
        %v230 = vld [vmem:[%s179 + $0x8] sm:$0xff]
        %v231 = vld [vmem:[%s179 + $0x10] sm:$0xff]
        %v232 = vld [vmem:[%s179 + $0x18] sm:$0xff]
        %v233 = vld [vmem:[%s179 + $0x20] sm:$0xff]
        %v234 = vld [vmem:[%s179 + $0x28] sm:$0xff]
        %v235 = vld [vmem:[%s179 + $0x30] sm:$0xff]
        %v236 = vld [vmem:[%s179 + $0x38] sm:$0xff]
        %v237 = vld [vmem:[%s179 + $0x40] sm:$0xff]
        %v238 = vld [vmem:[%s179 + $0x48] sm:$0xff]
        %v239 = vld [vmem:[%s179 + $0x50] sm:$0xff]
        %v240 = vld [vmem:[%s179 + $0x58] sm:$0xff]
        %v241 = vld [vmem:[%s179 + $0x60] sm:$0xff]
        %v242 = vld [vmem:[%s179 + $0x68] sm:$0xff]
        %v243 = vld [vmem:[%s179 + $0x70] sm:$0xff]
        %v244 = vld [vmem:[%s179 + $0x78] sm:$0xff]
        %v245 = vadd.f32 %v229, 0.0
        %v246 = vadd.f32 %v230, 0.0
        %v247 = vadd.f32 %v231, 0.0
        %v248 = vadd.f32 %v232, 0.0
        %v249 = vadd.f32 %v233, 0.0
        %v250 = vadd.f32 %v234, 0.0
        %v251 = vadd.f32 %v235, 0.0
        %v252 = vadd.f32 %v236, 0.0
        %v253 = vadd.f32 %v237, 0.0
        %v254 = vadd.f32 %v238, 0.0
        %v255 = vadd.f32 %v239, 0.0
        %v256 = vadd.f32 %v240, 0.0
        %v257 = vadd.f32 %v241, 0.0
        %v258 = vadd.f32 %v242, 0.0
        %v259 = vadd.f32 %v243, 0.0
        %v260 = vadd.f32 %v244, 0.0
        %v261 = vadd.f32 %v245, %v246
        %262 = vadd.xlane.f32.xlu0 %v261
        %v263 = vpop.xlane.xlu0 %262
        %v264 = vadd.f32 %v247, %v248
        %265 = vadd.xlane.f32.xlu0 %v264
        %v266 = vpop.xlane.xlu0 %265
        %v267 = vadd.f32 %v249, %v250
        %268 = vadd.xlane.f32.xlu0 %v267
        %v269 = vpop.xlane.xlu0 %268
        %v270 = vadd.f32 %v251, %v252
        %271 = vadd.xlane.f32.xlu0 %v270
        %v272 = vpop.xlane.xlu0 %271
        %v273 = vadd.f32 %v253, %v254
        %274 = vadd.xlane.f32.xlu0 %v273
        %v275 = vpop.xlane.xlu0 %274
        %v276 = vadd.f32 %v255, %v256
        %277 = vadd.xlane.f32.xlu0 %v276
        %v278 = vpop.xlane.xlu0 %277
        %v279 = vadd.f32 %v257, %v258
        %280 = vadd.xlane.f32.xlu0 %v279
        %v281 = vpop.xlane.xlu0 %280
        %v282 = vadd.f32 %v259, %v260
        %283 = vadd.xlane.f32.xlu0 %v282
        %v284 = vpop.xlane.xlu0 %283
        %v285 = vmax.f32 %v229, %v230
        %286 = vmax.xlane.f32.xlu0 %v285
        %v287 = vpop.xlane.xlu0 %286
        %v288 = vmax.f32 %v231, %v232
        %289 = vmax.xlane.f32.xlu0 %v288
        %v290 = vpop.xlane.xlu0 %289
        %v291 = vmax.f32 %v233, %v234
        %292 = vmax.xlane.f32.xlu0 %v291
        %v293 = vpop.xlane.xlu0 %292
        %v294 = vmax.f32 %v235, %v236
        %295 = vmax.xlane.f32.xlu0 %v294
        %v296 = vpop.xlane.xlu0 %295
        %v297 = vmax.f32 %v237, %v238
        %298 = vmax.xlane.f32.xlu0 %v297
        %v299 = vpop.xlane.xlu0 %298
        %v300 = vmax.f32 %v239, %v240
        %301 = vmax.xlane.f32.xlu0 %v300
        %v302 = vpop.xlane.xlu0 %301
        %v303 = vmax.f32 %v241, %v242
        %304 = vmax.xlane.f32.xlu0 %v303
        %v305 = vpop.xlane.xlu0 %304
        %v306 = vmax.f32 %v243, %v244
        %307 = vmax.xlane.f32.xlu0 %v306
        %v308 = vpop.xlane.xlu0 %307
        %v309 = vld [vmem:[#allocation2] sm:$0xff]
        %v310 = vld [vmem:[#allocation2 + $0x8] sm:$0xff]
        %v311 = vld [vmem:[#allocation2 + $0x10] sm:$0xff]
        %v312 = vld [vmem:[#allocation2 + $0x18] sm:$0xff]
        %v313 = vld [vmem:[#allocation2 + $0x20] sm:$0xff]
        %v314 = vld [vmem:[#allocation2 + $0x28] sm:$0xff]
        %v315 = vld [vmem:[#allocation2 + $0x30] sm:$0xff]
        %v316 = vld [vmem:[#allocation2 + $0x38] sm:$0xff]
        %v317 = vadd.f32 %v309, %v263
        %v318 = vadd.f32 %v310, %v266
        %v319 = vadd.f32 %v311, %v269
        %v320 = vadd.f32 %v312, %v272
        %v321 = vadd.f32 %v313, %v275
        %v322 = vadd.f32 %v314, %v278
        %v323 = vadd.f32 %v315, %v281
        %v324 = vadd.f32 %v316, %v284
        %vm325 = vcmask 7168
        %326 = vst.msk [vmem:[#allocation2] sm:$0xff] %vm325, %v317
        %327 = vst.msk [vmem:[#allocation2 + $0x8] sm:$0xff] %vm325, %v318
        %328 = vst.msk [vmem:[#allocation2 + $0x10] sm:$0xff] %vm325, %v319
        %329 = vst.msk [vmem:[#allocation2 + $0x18] sm:$0xff] %vm325, %v320
        %330 = vst.msk [vmem:[#allocation2 + $0x20] sm:$0xff] %vm325, %v321
        %331 = vst.msk [vmem:[#allocation2 + $0x28] sm:$0xff] %vm325, %v322
        %332 = vst.msk [vmem:[#allocation2 + $0x30] sm:$0xff] %vm325, %v323
        %333 = vst.msk [vmem:[#allocation2 + $0x38] sm:$0xff] %vm325, %v324
        %v334 = vld [vmem:[#allocation3] sm:$0xff]
        %v335 = vld [vmem:[#allocation3 + $0x8] sm:$0xff]
        %v336 = vld [vmem:[#allocation3 + $0x10] sm:$0xff]
        %v337 = vld [vmem:[#allocation3 + $0x18] sm:$0xff]
        %v338 = vld [vmem:[#allocation3 + $0x20] sm:$0xff]
        %v339 = vld [vmem:[#allocation3 + $0x28] sm:$0xff]
        %v340 = vld [vmem:[#allocation3 + $0x30] sm:$0xff]
        %v341 = vld [vmem:[#allocation3 + $0x38] sm:$0xff]
        %v342 = vmax.f32 %v334, %v287
        %v343 = vmax.f32 %v335, %v290
        %v344 = vmax.f32 %v336, %v293
        %v345 = vmax.f32 %v337, %v296
        %v346 = vmax.f32 %v338, %v299
        %v347 = vmax.f32 %v339, %v302
        %v348 = vmax.f32 %v340, %v305
        %v349 = vmax.f32 %v341, %v308
        %350 = vst.msk [vmem:[#allocation3] sm:$0xff] %vm325, %v342
        %351 = vst.msk [vmem:[#allocation3 + $0x8] sm:$0xff] %vm325, %v343
        %352 = vst.msk [vmem:[#allocation3 + $0x10] sm:$0xff] %vm325, %v344
        %353 = vst.msk [vmem:[#allocation3 + $0x18] sm:$0xff] %vm325, %v345
        %354 = vst.msk [vmem:[#allocation3 + $0x20] sm:$0xff] %vm325, %v346
        %355 = vst.msk [vmem:[#allocation3 + $0x28] sm:$0xff] %vm325, %v347
        %356 = vst.msk [vmem:[#allocation3 + $0x30] sm:$0xff] %vm325, %v348
        %357 = vst.msk [vmem:[#allocation3 + $0x38] sm:$0xff] %vm325, %v349
        // Predicated region
        $region41: #{tpu_custom_call.1} parent=31 // pred_check
          %p358 = pneg %p208
        $region42: #{tpu_custom_call.1} parent=31 // pred_check_branch
          %360 = sbr.rel (%p358) target = $region44
        $region43: #{tpu_custom_call.1} parent=31 // pred_region
          %v361 = vld [vmem:[#allocation2] sm:$0xff]
          %v362 = vld [vmem:[#allocation2 + $0x8] sm:$0xff]
          %v363 = vld [vmem:[#allocation2 + $0x10] sm:$0xff]
          %v364 = vld [vmem:[#allocation2 + $0x18] sm:$0xff]
          %v365 = vld [vmem:[#allocation2 + $0x20] sm:$0xff]
          %v366 = vld [vmem:[#allocation2 + $0x28] sm:$0xff]
          %v367 = vld [vmem:[#allocation2 + $0x30] sm:$0xff]
          %v368 = vld [vmem:[#allocation2 + $0x38] sm:$0xff]
          %v369 = vmul.f32 %v361, 0.00390625
          %v370 = vmul.f32 %v362, 0.00390625
          %v371 = vmul.f32 %v363, 0.00390625
          %v372 = vmul.f32 %v364, 0.00390625
          %v373 = vmul.f32 %v365, 0.00390625
          %v374 = vmul.f32 %v366, 0.00390625
          %v375 = vmul.f32 %v367, 0.00390625
          %v376 = vmul.f32 %v368, 0.00390625
          %v377 = vld [vmem:[#allocation3] sm:$0xff]
          %v378 = vld [vmem:[#allocation3 + $0x8] sm:$0xff]
          %v379 = vld [vmem:[#allocation3 + $0x10] sm:$0xff]
          %v380 = vld [vmem:[#allocation3 + $0x18] sm:$0xff]
          %v381 = vld [vmem:[#allocation3 + $0x20] sm:$0xff]
          %v382 = vld [vmem:[#allocation3 + $0x28] sm:$0xff]
          %v383 = vld [vmem:[#allocation3 + $0x30] sm:$0xff]
          %v384 = vld [vmem:[#allocation3 + $0x38] sm:$0xff]
          %v385 = vld [vmem:[%s1] sm:$0xf]
          %v386 = vld [vmem:[%s2] sm:$0xff]
          %v387 = vld [vmem:[%s2 + $0x8] sm:$0xff]
          %v388 = vld [vmem:[%s2 + $0x10] sm:$0xff]
          %v389 = vld [vmem:[%s2 + $0x18] sm:$0xff]
          %v390 = vld [vmem:[%s2 + $0x20] sm:$0xff]
          %v391 = vld [vmem:[%s2 + $0x28] sm:$0xff]
          %v392 = vld [vmem:[%s2 + $0x30] sm:$0xff]
          %v393 = vld [vmem:[%s2 + $0x38] sm:$0xff]
          %vm394 = vcmask 523264
          %v396 = vsel %vm394, %v385, 0
          %398 = vmatprep.subr.mxu0 0.0
          %399 = vmatpush1.msra.mxu0 %v369
          %400 = vmatprep.subr.mxu0 0.0
          %401 = vmatpush1.msra.mxu0 %v370
          %402 = vmatprep.subr.mxu0 0.0
          %403 = vmatpush1.msra.mxu0 %v371
          %404 = vmatprep.subr.mxu0 0.0
          %405 = vmatpush1.msra.mxu0 %v372
          %406 = vmatprep.subr.mxu0 0.0
          %407 = vmatpush1.msra.mxu0 %v373
          %408 = vmatprep.subr.mxu0 0.0
          %409 = vmatpush1.msra.mxu0 %v374
          %410 = vmatprep.subr.mxu0 0.0
          %411 = vmatpush1.msra.mxu0 %v375
          %412 = vmatprep.subr.mxu0 0.0
          %413 = vmatpush1.msra.mxu0 %v376
          %414 = vmatprep.subr.mxu0 0.0
          %415 = vmatpush1.msra.mxu0 0.0
          %416 = vmatprep.subr.mxu0 0.0
          %417 = vmatpush1.msra.mxu0 0.0
          %418 = vmatprep.subr.mxu0 0.0
          %419 = vmatpush1.msra.mxu0 0.0
          %420 = vmatprep.subr.mxu0 0.0
          %421 = vmatpush1.msra.mxu0 0.0
          %422 = vmatprep.subr.mxu0 0.0
          %423 = vmatpush1.msra.mxu0 0.0
          %424 = vmatprep.subr.mxu0 0.0
          %425 = vmatpush1.msra.mxu0 0.0
          %426 = vmatprep.subr.mxu0 0.0
          %427 = vmatpush1.msra.mxu0 0.0
          %428 = vmatprep.subr.mxu0 0.0
          %429 = vmatpush1.msra.mxu0 0.0
          %430 = vmatprep.subr.mxu0 0.0
          %431 = vmatpush1.msra.mxu0 0.0
          %432 = vmatprep.subr.mxu0 0.0
          %433 = vmatpush1.msra.mxu0 0.0
          %434 = vmatprep.subr.mxu0 0.0
          %435 = vmatpush1.msra.mxu0 0.0
          %436 = vmatprep.subr.mxu0 0.0
          %437 = vmatpush1.msra.mxu0 0.0
          %438 = vmatprep.subr.mxu0 0.0
          %439 = vmatpush1.msra.mxu0 0.0
          %440 = vmatprep.subr.mxu0 0.0
          %441 = vmatpush1.msra.mxu0 0.0
          %442 = vmatprep.subr.mxu0 0.0
          %443 = vmatpush1.msra.mxu0 0.0
          %444 = vmatprep.subr.mxu0 0.0
          %445 = vmatpush1.msra.mxu0 0.0
          %446 = vmatprep.subr.mxu0 0.0
          %447 = vmatpush1.msra.mxu0 0.0
          %448 = vmatprep.subr.mxu0 0.0
          %449 = vmatpush1.msra.mxu0 0.0
          %450 = vmatprep.subr.mxu0 0.0
          %451 = vmatpush1.msra.mxu0 0.0
          %452 = vmatprep.subr.mxu0 0.0
          %453 = vmatpush1.msra.mxu0 0.0
          %454 = vmatprep.subr.mxu0 0.0
          %455 = vmatpush1.msra.mxu0 0.0
          %456 = vmatprep.subr.mxu0 0.0
          %457 = vmatpush1.msra.mxu0 0.0
          %458 = vmatprep.subr.mxu0 0.0
          %459 = vmatpush1.msra.mxu0 0.0
          %460 = vmatprep.subr.mxu0 0.0
          %461 = vmatpush1.msra.mxu0 0.0
          %462 = vmatprep.mubr.f32.mxu0 0.0
          %463 = vmatmul.mubr.f32.gmra.mrb[0].mxu0 %v396
          %v464 = vpop.f32.mrb[0].mxu0
          %v465 = vadd.f32 0.0, %v464
          %v466 = vpop.f32.mrb[0].mxu0
          %467 = vdwg.mxu0
          %v468 = vmax.f32 %v465, 0.0
          %469 = vmatprep.subr.mxu0 0.0
          %470 = vmatpush1.msra.mxu0 %v377
          %471 = vmatprep.subr.mxu0 0.0
          %472 = vmatpush1.msra.mxu0 %v378
          %473 = vmatprep.subr.mxu0 0.0
          %474 = vmatpush1.msra.mxu0 %v379
          %475 = vmatprep.subr.mxu0 0.0
          %476 = vmatpush1.msra.mxu0 %v380
          %477 = vmatprep.subr.mxu0 0.0
          %478 = vmatpush1.msra.mxu0 %v381
          %479 = vmatprep.subr.mxu0 0.0
          %480 = vmatpush1.msra.mxu0 %v382
          %481 = vmatprep.subr.mxu0 0.0
          %482 = vmatpush1.msra.mxu0 %v383
          %483 = vmatprep.subr.mxu0 0.0
          %484 = vmatpush1.msra.mxu0 %v384
          %485 = vmatprep.subr.mxu0 0.0
          %486 = vmatpush1.msra.mxu0 0.0
          %487 = vmatprep.subr.mxu0 0.0
          %488 = vmatpush1.msra.mxu0 0.0
          %489 = vmatprep.subr.mxu0 0.0
          %490 = vmatpush1.msra.mxu0 0.0
          %491 = vmatprep.subr.mxu0 0.0
          %492 = vmatpush1.msra.mxu0 0.0
          %493 = vmatprep.subr.mxu0 0.0
          %494 = vmatpush1.msra.mxu0 0.0
          %495 = vmatprep.subr.mxu0 0.0
          %496 = vmatpush1.msra.mxu0 0.0
          %497 = vmatprep.subr.mxu0 0.0
          %498 = vmatpush1.msra.mxu0 0.0
          %499 = vmatprep.subr.mxu0 0.0
          %500 = vmatpush1.msra.mxu0 0.0
          %501 = vmatprep.subr.mxu0 0.0
          %502 = vmatpush1.msra.mxu0 0.0
          %503 = vmatprep.subr.mxu0 0.0
          %504 = vmatpush1.msra.mxu0 0.0
          %505 = vmatprep.subr.mxu0 0.0
          %506 = vmatpush1.msra.mxu0 0.0
          %507 = vmatprep.subr.mxu0 0.0
          %508 = vmatpush1.msra.mxu0 0.0
          %509 = vmatprep.subr.mxu0 0.0
          %510 = vmatpush1.msra.mxu0 0.0
          %511 = vmatprep.subr.mxu0 0.0
          %512 = vmatpush1.msra.mxu0 0.0
          %513 = vmatprep.subr.mxu0 0.0
          %514 = vmatpush1.msra.mxu0 0.0
          %515 = vmatprep.subr.mxu0 0.0
          %516 = vmatpush1.msra.mxu0 0.0
          %517 = vmatprep.subr.mxu0 0.0
          %518 = vmatpush1.msra.mxu0 0.0
          %519 = vmatprep.subr.mxu0 0.0
          %520 = vmatpush1.msra.mxu0 0.0
          %521 = vmatprep.subr.mxu0 0.0
          %522 = vmatpush1.msra.mxu0 0.0
          %523 = vmatprep.subr.mxu0 0.0
          %524 = vmatpush1.msra.mxu0 0.0
          %525 = vmatprep.subr.mxu0 0.0
          %526 = vmatpush1.msra.mxu0 0.0
          %527 = vmatprep.subr.mxu0 0.0
          %528 = vmatpush1.msra.mxu0 0.0
          %529 = vmatprep.subr.mxu0 0.0
          %530 = vmatpush1.msra.mxu0 0.0
          %531 = vmatprep.subr.mxu0 0.0
          %532 = vmatpush1.msra.mxu0 0.0
          %533 = vmatprep.mubr.f32.mxu0 0.0
          %534 = vmatmul.mubr.f32.gmra.mrb[0].mxu0 %v396
          %v535 = vpop.f32.mrb[0].mxu0
          %v536 = vadd.f32 0.0, %v535
          %v537 = vpop.f32.mrb[0].mxu0
          %538 = vdwg.mxu0
          %v539 = vmax.f32 %v536, 0.0
          %v540 = vadd.f32 %v468, %v539
          %vm541 = vcmask 31744
          %v543 = vsel %vm541, %v386, 0
          %v546 = vsel %vm541, %v387, 0
          %v549 = vsel %vm541, %v388, 0
          %v552 = vsel %vm541, %v389, 0
          %v555 = vsel %vm541, %v390, 0
          %v558 = vsel %vm541, %v391, 0
          %v561 = vsel %vm541, %v392, 0
          %v564 = vsel %vm541, %v393, 0
          %vm566 = vcmask 1043456
          %v568 = vsel %vm566, %v540, 0
          %570 = vmatprep.subr.mxu0 0.0
          %571 = vmatpush1.msra.mxu0 %v568
          %572 = vmatprep.subr.mxu0 0.0
          %573 = vmatpush1.msra.mxu0 0.0
          %574 = vmatprep.subr.mxu0 0.0
          %575 = vmatpush1.msra.mxu0 0.0
          %576 = vmatprep.subr.mxu0 0.0
          %577 = vmatpush1.msra.mxu0 0.0
          %578 = vmatprep.subr.mxu0 0.0
          %579 = vmatpush1.msra.mxu0 0.0
          %580 = vmatprep.subr.mxu0 0.0
          %581 = vmatpush1.msra.mxu0 0.0
          %582 = vmatprep.subr.mxu0 0.0
          %583 = vmatpush1.msra.mxu0 0.0
          %584 = vmatprep.subr.mxu0 0.0
          %585 = vmatpush1.msra.mxu0 0.0
          %586 = vmatprep.subr.mxu0 0.0
          %587 = vmatpush1.msra.mxu0 0.0
          %588 = vmatprep.subr.mxu0 0.0
          %589 = vmatpush1.msra.mxu0 0.0
          %590 = vmatprep.subr.mxu0 0.0
          %591 = vmatpush1.msra.mxu0 0.0
          %592 = vmatprep.subr.mxu0 0.0
          %593 = vmatpush1.msra.mxu0 0.0
          %594 = vmatprep.subr.mxu0 0.0
          %595 = vmatpush1.msra.mxu0 0.0
          %596 = vmatprep.subr.mxu0 0.0
          %597 = vmatpush1.msra.mxu0 0.0
          %598 = vmatprep.subr.mxu0 0.0
          %599 = vmatpush1.msra.mxu0 0.0
          %600 = vmatprep.subr.mxu0 0.0
          %601 = vmatpush1.msra.mxu0 0.0
          %602 = vmatprep.subr.mxu0 0.0
          %603 = vmatpush1.msra.mxu0 0.0
          %604 = vmatprep.subr.mxu0 0.0
          %605 = vmatpush1.msra.mxu0 0.0
          %606 = vmatprep.subr.mxu0 0.0
          %607 = vmatpush1.msra.mxu0 0.0
          %608 = vmatprep.subr.mxu0 0.0
          %609 = vmatpush1.msra.mxu0 0.0
          %610 = vmatprep.subr.mxu0 0.0
          %611 = vmatpush1.msra.mxu0 0.0
          %612 = vmatprep.subr.mxu0 0.0
          %613 = vmatpush1.msra.mxu0 0.0
          %614 = vmatprep.subr.mxu0 0.0
          %615 = vmatpush1.msra.mxu0 0.0
          %616 = vmatprep.subr.mxu0 0.0
          %617 = vmatpush1.msra.mxu0 0.0
          %618 = vmatprep.subr.mxu0 0.0
          %619 = vmatpush1.msra.mxu0 0.0
          %620 = vmatprep.subr.mxu0 0.0
          %621 = vmatpush1.msra.mxu0 0.0
          %622 = vmatprep.subr.mxu0 0.0
          %623 = vmatpush1.msra.mxu0 0.0
          %624 = vmatprep.subr.mxu0 0.0
          %625 = vmatpush1.msra.mxu0 0.0
          %626 = vmatprep.subr.mxu0 0.0
          %627 = vmatpush1.msra.mxu0 0.0
          %628 = vmatprep.subr.mxu0 0.0
          %629 = vmatpush1.msra.mxu0 0.0
          %630 = vmatprep.subr.mxu0 0.0
          %631 = vmatpush1.msra.mxu0 0.0
          %632 = vmatprep.subr.mxu0 0.0
          %633 = vmatpush1.msra.mxu0 0.0
          %634 = vmatprep.mubr.f32.mxu0 0.0
          %635 = vmatmul.mubr.f32.gmra.mrb[0].mxu0 %v543
          %v636 = vpop.f32.mrb[0].mxu0
          %v637 = vadd.f32 0.0, %v636
          %v638 = vpop.f32.mrb[0].mxu0
          %639 = vmatprep.mubr.f32.mxu0 0.0
          %640 = vmatmul.mubr.f32.gmra.mrb[0].mxu0 %v546
          %v641 = vpop.f32.mrb[0].mxu0
          %v642 = vadd.f32 0.0, %v641
          %v643 = vpop.f32.mrb[0].mxu0
          %644 = vmatprep.mubr.f32.mxu0 0.0
          %645 = vmatmul.mubr.f32.gmra.mrb[0].mxu0 %v549
          %v646 = vpop.f32.mrb[0].mxu0
          %v647 = vadd.f32 0.0, %v646
          %v648 = vpop.f32.mrb[0].mxu0
          %649 = vmatprep.mubr.f32.mxu0 0.0
          %650 = vmatmul.mubr.f32.gmra.mrb[0].mxu0 %v552
          %v651 = vpop.f32.mrb[0].mxu0
          %v652 = vadd.f32 0.0, %v651
          %v653 = vpop.f32.mrb[0].mxu0
          %654 = vmatprep.mubr.f32.mxu0 0.0
          %655 = vmatmul.mubr.f32.gmra.mrb[0].mxu0 %v555
          %v656 = vpop.f32.mrb[0].mxu0
          %v657 = vadd.f32 0.0, %v656
          %v658 = vpop.f32.mrb[0].mxu0
          %659 = vmatprep.mubr.f32.mxu0 0.0
          %660 = vmatmul.mubr.f32.gmra.mrb[0].mxu0 %v558
          %v661 = vpop.f32.mrb[0].mxu0
          %v662 = vadd.f32 0.0, %v661
          %v663 = vpop.f32.mrb[0].mxu0
          %664 = vmatprep.mubr.f32.mxu0 0.0
          %665 = vmatmul.mubr.f32.gmra.mrb[0].mxu0 %v561
          %v666 = vpop.f32.mrb[0].mxu0
          %v667 = vadd.f32 0.0, %v666
          %v668 = vpop.f32.mrb[0].mxu0
          %669 = vmatprep.mubr.f32.mxu0 0.0
          %670 = vmatmul.mubr.f32.gmra.mrb[0].mxu0 %v564
          %v671 = vpop.f32.mrb[0].mxu0
          %v672 = vadd.f32 0.0, %v671
          %v673 = vpop.f32.mrb[0].mxu0
          %674 = vdwg.mxu0
          %v675 = vxor.u32 %v637, 2147483648
          %v676 = vxor.u32 %v642, 2147483648
          %v677 = vxor.u32 %v647, 2147483648
          %v678 = vxor.u32 %v652, 2147483648
          %v679 = vxor.u32 %v657, 2147483648
          %v680 = vxor.u32 %v662, 2147483648
          %v681 = vxor.u32 %v667, 2147483648
          %v682 = vxor.u32 %v672, 2147483648
          %v683 = vmul.f32 %v675, 1.442695
          %v684 = vpow.pop %v683
          %v685 = vmul.f32 %v676, 1.442695
          %v686 = vpow.pop %v685
          %v687 = vmul.f32 %v677, 1.442695
          %v688 = vpow.pop %v687
          %v689 = vmul.f32 %v678, 1.442695
          %v690 = vpow.pop %v689
          %v691 = vmul.f32 %v679, 1.442695
          %v692 = vpow.pop %v691
          %v693 = vmul.f32 %v680, 1.442695
          %v694 = vpow.pop %v693
          %v695 = vmul.f32 %v681, 1.442695
          %v696 = vpow.pop %v695
          %v697 = vmul.f32 %v682, 1.442695
          %v698 = vpow.pop %v697
          %v699 = vadd.f32 %v684, 1.0
          %v700 = vadd.f32 %v686, 1.0
          %v701 = vadd.f32 %v688, 1.0
          %v702 = vadd.f32 %v690, 1.0
          %v703 = vadd.f32 %v692, 1.0
          %v704 = vadd.f32 %v694, 1.0
          %v705 = vadd.f32 %v696, 1.0
          %v706 = vadd.f32 %v698, 1.0
          %v707 = vrcp.pop %v699
          %v708 = vmul.f32 1.0, %v707
          %v709 = vrcp.pop %v700
          %v710 = vmul.f32 1.0, %v709
          %v711 = vrcp.pop %v701
          %v712 = vmul.f32 1.0, %v711
          %v713 = vrcp.pop %v702
          %v714 = vmul.f32 1.0, %v713
          %v715 = vrcp.pop %v703
          %v716 = vmul.f32 1.0, %v715
          %v717 = vrcp.pop %v704
          %v718 = vmul.f32 1.0, %v717
          %v719 = vrcp.pop %v705
          %v720 = vmul.f32 1.0, %v719
          %v721 = vrcp.pop %v706
          %v722 = vmul.f32 1.0, %v721
          %723 = vst.msk [vmem:[%s207] sm:$0xff] %vm325, %v708
          %724 = vst.msk [vmem:[%s207 + $0x8] sm:$0xff] %vm325, %v710
          %725 = vst.msk [vmem:[%s207 + $0x10] sm:$0xff] %vm325, %v712
          %726 = vst.msk [vmem:[%s207 + $0x18] sm:$0xff] %vm325, %v714
          %727 = vst.msk [vmem:[%s207 + $0x20] sm:$0xff] %vm325, %v716
          %728 = vst.msk [vmem:[%s207 + $0x28] sm:$0xff] %vm325, %v718
          %729 = vst.msk [vmem:[%s207 + $0x30] sm:$0xff] %vm325, %v720
          %730 = vst.msk [vmem:[%s207 + $0x38] sm:$0xff] %vm325, %v722
        $region44: #{tpu_custom_call.1} parent=31 // pred_fallthru
          _
        %p731 = scmp.lt.s32.totalorder %s21, 1
        %s732 = scalar_select %p731, %s21, 1
        %s733 = smul.addr %s732, 8
        %s734 = smul.addr %s733, 8
        %s735 = scalar_lea.vmem %s3, %s734
        // Predicated region
        $region45: #{tpu_custom_call.1} parent=31 // pred_check
          %p736 = pneg %p117
        $region46: #{tpu_custom_call.1} parent=31 // pred_check_branch
          %738 = sbr.rel (%p736) target = $region48
        $region47: #{tpu_custom_call.1} parent=31 // pred_region
          _
        $region48: #{tpu_custom_call.1} parent=31 // pred_fallthru
          _
      $region32: #{tpu_custom_call.1} parent=5 // pred_fallthru
        _
      %p739 = scmp.le.s32.totalorder 2, %s12
      // Predicated region
      $region49: #{tpu_custom_call.1} parent=5 // pred_check
        %p740 = pneg %p739
      $region50: #{tpu_custom_call.1} parent=5 // pred_check_branch
        %742 = sbr.rel (%p740) target = $region52
      $region51: #{tpu_custom_call.1} parent=5 // pred_region
        %s743 = ssub.s32 %s12, 2
        // Predicated region
        $region53: #{tpu_custom_call.1} parent=51 // pred_check
          %p744 = pneg %p123
        $region54: #{tpu_custom_call.1} parent=51 // pred_check_branch
          %746 = sbr.rel (%p744) target = $region56
        $region55: #{tpu_custom_call.1} parent=51 // pred_region
          %p747 = scmp.lt.s32.totalorder %s23, 1
          %s748 = scalar_select %p747, %s23, 1
          %s749 = smul.addr %s748, 8
          %s750 = smul.addr %s749, 8
          %s751 = scalar_lea.vmem %s3, %s750
        $region56: #{tpu_custom_call.1} parent=51 // pred_fallthru
          _
      $region52: #{tpu_custom_call.1} parent=5 // pred_fallthru
        _
    $region6: #{tpu_custom_call.1} parent=1 // loop_footer
      %s16 = sadd.s32 1, %s12
    $region7: #{tpu_custom_call.1} parent=1 // loop_footer_branch
      %11 = sbr.rel target = $region3
    $region8: #{tpu_custom_call.1} parent=1 // loop_exit
      _
    %752 = vsyncpa [#allocation5], 1
    %s753 = scalar_lea.sflag [#allocation5], 1
    %754 = vsyncpa %s753, 1

</llo_original>
